<compile_context>
chip_gen: v7x
topology: tpu7x:2x2x1
jax: 0.10.0
libtpu: 0.0.40
codegen_flags: <defaults>
</compile_context>

<pallas_src>
import functools

import jax
import jax.numpy as jnp
from jax import lax
from jax.experimental import pallas as pl
from jax.experimental.pallas import tpu as pltpu


# --------------------------------------------------------------------------- #
# Pass 1: per-channel BN statistics -> folded (scale, shift)
# --------------------------------------------------------------------------- #
def _bn_stats_kernel(x_ref, w1t_ref, gamma_ref, beta_ref,
                     scale_ref, shift_ref, *, eps, m_total):
    # x_ref:     (1, C_in, TL)    input tile, NCL layout (L on lanes)
    # w1t_ref:   (C_hid, C_in)    bf16 weights of conv1 (already in (out,in) layout)
    # gamma_ref: (C_hid, 1) f32
    # beta_ref:  (C_hid, 1) f32
    # scale_ref: (C_hid, 1) f32   accumulates sum(h);   finalized to gamma*rsqrt(var+eps)
    # shift_ref: (C_hid, 1) f32   accumulates sum(h*h); finalized to beta - mean*scale
    bi = pl.program_id(0)
    li = pl.program_id(1)

    @pl.when((bi == 0) & (li == 0))
    def _init():
        scale_ref[...] = jnp.zeros_like(scale_ref)
        shift_ref[...] = jnp.zeros_like(shift_ref)

    x = x_ref[0].astype(jnp.bfloat16)                                 # (C_in, TL)
    h = jnp.dot(w1t_ref[...], x, preferred_element_type=jnp.float32)  # (C_hid, TL) f32
    scale_ref[...] += jnp.sum(h, axis=1, keepdims=True)
    shift_ref[...] += jnp.sum(h * h, axis=1, keepdims=True)

    @pl.when((bi == pl.num_programs(0) - 1) & (li == pl.num_programs(1) - 1))
    def _finalize():
        s1 = scale_ref[...]                      # sum(h)
        s2 = shift_ref[...]                      # sum(h^2)
        mean = s1 / m_total
        var = jnp.maximum(s2 / m_total - mean * mean, 0.0)   # biased variance (PyTorch BN fwd)
        inv = lax.rsqrt(var + eps)
        scale = gamma_ref[...] * inv
        shift = beta_ref[...] - mean * scale
        scale_ref[...] = scale
        shift_ref[...] = shift


# --------------------------------------------------------------------------- #
# Pass 2: conv1 -> folded BN (one FMA) -> ReLU -> conv2
# --------------------------------------------------------------------------- #
def _mlp_apply_kernel(x_ref, w1t_ref, w2t_ref, scale_ref, shift_ref, o_ref):
    # x_ref:   (1, C_in, TL)
    # w1t_ref: (C_hid, C_in) bf16
    # w2t_ref: (C_out, C_hid) bf16
    # scale_ref/shift_ref: (C_hid, 1) f32 (folded BN)
    # o_ref:   (1, C_out, TL)  lane-dense output tile
    x = x_ref[0].astype(jnp.bfloat16)                                  # (C_in, TL)
    h = jnp.dot(w1t_ref[...], x, preferred_element_type=jnp.float32)   # (C_hid, TL) f32
    h = h * scale_ref[...] + shift_ref[...]                            # BN folded into 1 FMA
    h = jnp.maximum(h, 0.0)                                            # ReLU
    out = jnp.dot(w2t_ref[...], h.astype(jnp.bfloat16),
                  preferred_element_type=jnp.float32)                  # (C_out, TL)
    o_ref[0] = out.astype(o_ref.dtype)


# --------------------------------------------------------------------------- #
# Wrapper
# --------------------------------------------------------------------------- #
def _pick_tile_l(L, max_tl=4096):
    """Largest multiple of 128 that divides L (capped), else full L."""
    if L % 128 != 0:
        return L
    best = 128
    t = 128
    cap = min(L, max_tl)
    while t <= cap:
        if L % t == 0:
            best = t
        t += 128
    return best


def _vmem_limit_bytes(tl, c_in, c_hid, c_out):
    # double-buffered x/out tiles + f32 h temporaries + slack; clamp to a safe range
    tile = tl * 4 * (2 * c_in + 2 * c_out + 6 * c_hid) + (2 << 20)
    return int(min(max(tile, 16 * 1024 * 1024), 32 * 1024 * 1024))


def mlp1d_forward(x_ncl, conv1_w, conv2_w, bn_gamma, bn_beta, *, eps=1e-5):
    """x_ncl: (N, C_in, L); conv weights in PyTorch layout (C_out, C_in, 1)."""
    N, C_in, L = x_ncl.shape
    C_hid = conv1_w.shape[0]
    C_out = conv2_w.shape[0]

    TL = _pick_tile_l(L)
    num_l = L // TL
    m_total = float(N * L)
    itemsize = x_ncl.dtype.itemsize
    vmem_limit = _vmem_limit_bytes(TL, C_in, C_hid, C_out)

    # Weight / param prep (tiny; no activation transposes anywhere).
    w1t = conv1_w[:, :, 0].astype(jnp.bfloat16)            # (C_hid, C_in)
    w2t = conv2_w[:, :, 0].astype(jnp.bfloat16)            # (C_out, C_hid)
    gamma = bn_gamma.reshape(C_hid, 1).astype(jnp.float32)
    beta = bn_beta.reshape(C_hid, 1).astype(jnp.float32)

    # ---------------- pass 1: BN stats -> folded scale/shift ---------------- #
    stats_cost = pl.CostEstimate(
        flops=int(2 * N * L * C_in * C_hid + 3 * N * L * C_hid),
        transcendentals=0,
        bytes_accessed=int(N * L * C_in * itemsize + 2 * C_hid * 4),
    )
    scale, shift = pl.pallas_call(
        functools.partial(_bn_stats_kernel, eps=eps, m_total=m_total),
        out_shape=(jax.ShapeDtypeStruct((C_hid, 1), jnp.float32),
                   jax.ShapeDtypeStruct((C_hid, 1), jnp.float32)),
        grid_spec=pltpu.PrefetchScalarGridSpec(
            num_scalar_prefetch=0,
            grid=(N, num_l),
            in_specs=[
                pl.BlockSpec((1, C_in, TL), lambda bi, li: (bi, 0, li)),
                pl.BlockSpec((C_hid, C_in), lambda bi, li: (0, 0)),
                pl.BlockSpec((C_hid, 1), lambda bi, li: (0, 0)),
                pl.BlockSpec((C_hid, 1), lambda bi, li: (0, 0)),
            ],
            out_specs=(pl.BlockSpec((C_hid, 1), lambda bi, li: (0, 0)),
                       pl.BlockSpec((C_hid, 1), lambda bi, li: (0, 0))),
        ),
        compiler_params=pltpu.CompilerParams(
            dimension_semantics=("arbitrary", "arbitrary"),
            vmem_limit_bytes=vmem_limit),
        cost_estimate=stats_cost,
    )(x_ncl, w1t, gamma, beta)

    # ---------------- pass 2: conv1 -> BN(FMA) -> ReLU -> conv2 ------------- #
    apply_cost = pl.CostEstimate(
        flops=int(2 * N * L * (C_in * C_hid + C_hid * C_out) + 3 * N * L * C_hid),
        transcendentals=0,
        bytes_accessed=int(N * L * (C_in + C_out) * itemsize),
    )
    out = pl.pallas_call(
        _mlp_apply_kernel,
        out_shape=jax.ShapeDtypeStruct((N, C_out, L), x_ncl.dtype),
        grid_spec=pltpu.PrefetchScalarGridSpec(
            num_scalar_prefetch=0,
            grid=(N, num_l),
            in_specs=[
                pl.BlockSpec((1, C_in, TL), lambda bi, li: (bi, 0, li)),
                pl.BlockSpec((C_hid, C_in), lambda bi, li: (0, 0)),
                pl.BlockSpec((C_out, C_hid), lambda bi, li: (0, 0)),
                pl.BlockSpec((C_hid, 1), lambda bi, li: (0, 0)),
                pl.BlockSpec((C_hid, 1), lambda bi, li: (0, 0)),
            ],
            out_specs=pl.BlockSpec((1, C_out, TL), lambda bi, li: (bi, 0, li)),
        ),
        compiler_params=pltpu.CompilerParams(
            dimension_semantics=("parallel", "parallel"),
            vmem_limit_bytes=vmem_limit),
        cost_estimate=apply_cost,
    )(x_ncl, w1t, w2t, scale, shift)

    return out  # (N, C_out, L), NCL layout — no post-kernel transpose


# --------------------------------------------------------------------------- #
# Reference (pure JAX, f32) for a loose sanity check
# --------------------------------------------------------------------------- #
def _reference(x, conv1_w, conv2_w, gamma, beta, eps=1e-5):
    w1 = conv1_w[:, :, 0]                                   # (C_hid, C_in)
    w2 = conv2_w[:, :, 0]                                   # (C_out, C_hid)
    h = jnp.einsum('oc,ncl->nol', w1, x)                    # (N, C_hid, L)
    mean = jnp.mean(h, axis=(0, 2), keepdims=True)
    var = jnp.mean((h - mean) ** 2, axis=(0, 2), keepdims=True)
    hn = (h - mean) * lax.rsqrt(var + eps)
    hn = hn * gamma[None, :, None] + beta[None, :, None]
    ha = jnp.maximum(hn, 0.0)
    return jnp.einsum('oc,ncl->nol', w2, ha)


if __name__ == "__main__":
    # Small shapes consistent with the block's forward: x is (N, C_in, L).
    N, C_in, L = 2, 4, 512
    C_hid, C_out = 32, 8

    key = jax.random.PRNGKey(0)
    kx, kw1, kw2 = jax.random.split(key, 3)

    x = jax.random.normal(kx, (N, C_in, L), dtype=jnp.float32)
    conv1_w = jax.random.normal(kw1, (C_hid, C_in, 1), dtype=jnp.float32) * 0.1
    conv2_w = jax.random.normal(kw2, (C_out, C_hid, 1), dtype=jnp.float32) * 0.1
    bn_gamma = jnp.ones((C_hid,), dtype=jnp.float32)
    bn_beta = jnp.zeros((C_hid,), dtype=jnp.float32)

    out = mlp1d_forward(x, conv1_w, conv2_w, bn_gamma, bn_beta)
    jax.block_until_ready(out)
    assert out.shape == (N, C_out, L)

    # Loose sanity check vs. f32 reference (kernel uses bf16 MXU inputs, f32 accum).
    ref = _reference(x, conv1_w, conv2_w, bn_gamma, bn_beta)
    max_err = float(jnp.max(jnp.abs(out - ref)))
    assert max_err < 0.1, f"max abs error too large: {max_err}"

    print("KERNEL_OK")
</pallas_src>

<mosaic_0001>
module attributes {stable_mosaic.version = 11 : i64} {
  func.func @_bn_stats_kernel(%arg0: i32, %arg1: i32, %arg2: memref<1x4x512xf32, #tpu.memory_space<vmem>>, %arg3: memref<32x4xbf16, #tpu.memory_space<vmem>>, %arg4: memref<32x1xf32, #tpu.memory_space<vmem>>, %arg5: memref<32x1xf32, #tpu.memory_space<vmem>>, %arg6: memref<32x1xf32, #tpu.memory_space<vmem>>, %arg7: memref<32x1xf32, #tpu.memory_space<vmem>>) attributes {dimension_semantics = [#tpu.dimension_semantics<arbitrary>, #tpu.dimension_semantics<arbitrary>], iteration_bounds = array<i64: 2, 1>, scalar_prefetch = 0 : i64, scratch_operands = 0 : i64, tpu.core_type = #tpu.core_type<tc>, window_params = [{transform_indices = @transform_0, window_bounds = array<i64: 1, 4, 512>}, {pipeline_mode = #tpu.pipeline_mode<synchronous>, transform_indices = @transform_1, window_bounds = array<i64: 32, 4>}, {pipeline_mode = #tpu.pipeline_mode<synchronous>, transform_indices = @transform_2, window_bounds = array<i64: 32, 1>}, {pipeline_mode = #tpu.pipeline_mode<synchronous>, transform_indices = @transform_3, window_bounds = array<i64: 32, 1>}, {pipeline_mode = #tpu.pipeline_mode<synchronous>, transform_indices = @transform_4, window_bounds = array<i64: 32, 1>}, {pipeline_mode = #tpu.pipeline_mode<synchronous>, transform_indices = @transform_5, window_bounds = array<i64: 32, 1>}]} {
    %c0_i32 = arith.constant 0 : i32
    %0 = arith.cmpi eq, %arg0, %c0_i32 : i32
    %c0_i32_0 = arith.constant 0 : i32
    %1 = arith.cmpi eq, %arg1, %c0_i32_0 : i32
    %2 = arith.andi %0, %1 : i1
    %3 = arith.extui %2 : i1 to i32
    %c0_i32_1 = arith.constant 0 : i32
    %4 = arith.cmpi ne, %3, %c0_i32_1 : i32
    scf.if %4 {
      %cst_18 = arith.constant 0.000000e+00 : f32
      %26 = vector.broadcast %cst_18 : f32 to vector<32x1xf32>
      %c0_19 = arith.constant 0 : index
      %c0_20 = arith.constant 0 : index
      %27 = vector.load %arg6[%c0_19, %c0_20] : memref<32x1xf32, #tpu.memory_space<vmem>>, vector<32x1xf32>
      tpu.vector_store %arg6[%c0_19, %c0_20], %26 {strides = array<i32>} : memref<32x1xf32, #tpu.memory_space<vmem>>, vector<32x1xf32>,
      %cst_21 = arith.constant 0.000000e+00 : f32
      %28 = vector.broadcast %cst_21 : f32 to vector<32x1xf32>
      %c0_22 = arith.constant 0 : index
      %c0_23 = arith.constant 0 : index
      %29 = vector.load %arg7[%c0_22, %c0_23] : memref<32x1xf32, #tpu.memory_space<vmem>>, vector<32x1xf32>
      tpu.vector_store %arg7[%c0_22, %c0_23], %28 {strides = array<i32>} : memref<32x1xf32, #tpu.memory_space<vmem>>, vector<32x1xf32>,
    } else {
    }
    %c0 = arith.constant 0 : index
    %c0_2 = arith.constant 0 : index
    %c0_3 = arith.constant 0 : index
    %5 = vector.load %arg2[%c0, %c0_2, %c0_3] : memref<1x4x512xf32, #tpu.memory_space<vmem>>, vector<1x4x512xf32>
    %6 = vector.shape_cast %5 : vector<1x4x512xf32> to vector<4x512xf32>
    %7 = arith.truncf %6 : vector<4x512xf32> to vector<4x512xbf16>
    %c0_4 = arith.constant 0 : index
    %c0_5 = arith.constant 0 : index
    %8 = vector.load %arg3[%c0_4, %c0_5] : memref<32x4xbf16, #tpu.memory_space<vmem>>, vector<32x4xbf16>
    %cst = arith.constant dense<0.000000e+00> : vector<32x512xf32>
    %9 = tpu.matmul %8, %7, %cst {dimension_numbers = #tpu.dot_dimension_numbers<[1], [0], [0], [1], [0, 0, 1, 1], [], []>} : vector<32x4xbf16>, vector<4x512xbf16>, vector<32x512xf32> -> vector<32x512xf32>
    %c0_6 = arith.constant 0 : index
    %c0_7 = arith.constant 0 : index
    %10 = vector.load %arg6[%c0_6, %c0_7] : memref<32x1xf32, #tpu.memory_space<vmem>>, vector<32x1xf32>
    %cst_8 = arith.constant dense<0.000000e+00> : vector<32xf32>
    %11 = vector.multi_reduction <add>, %9, %cst_8 [1] : vector<32x512xf32> to vector<32xf32>
    %12 = vector.shape_cast %11 : vector<32xf32> to vector<32x1xf32>
    %13 = arith.addf %10, %12 : vector<32x1xf32>
    %c0_9 = arith.constant 0 : index
    %c0_10 = arith.constant 0 : index
    %14 = vector.load %arg6[%c0_9, %c0_10] : memref<32x1xf32, #tpu.memory_space<vmem>>, vector<32x1xf32>
    tpu.vector_store %arg6[%c0_9, %c0_10], %13 {strides = array<i32>} : memref<32x1xf32, #tpu.memory_space<vmem>>, vector<32x1xf32>,
    %c0_11 = arith.constant 0 : index
    %c0_12 = arith.constant 0 : index
    %15 = vector.load %arg7[%c0_11, %c0_12] : memref<32x1xf32, #tpu.memory_space<vmem>>, vector<32x1xf32>
    %16 = arith.mulf %9, %9 : vector<32x512xf32>
    %cst_13 = arith.constant dense<0.000000e+00> : vector<32xf32>
    %17 = vector.multi_reduction <add>, %16, %cst_13 [1] : vector<32x512xf32> to vector<32xf32>
    %18 = vector.shape_cast %17 : vector<32xf32> to vector<32x1xf32>
    %19 = arith.addf %15, %18 : vector<32x1xf32>
    %c0_14 = arith.constant 0 : index
    %c0_15 = arith.constant 0 : index
    %20 = vector.load %arg7[%c0_14, %c0_15] : memref<32x1xf32, #tpu.memory_space<vmem>>, vector<32x1xf32>
    tpu.vector_store %arg7[%c0_14, %c0_15], %19 {strides = array<i32>} : memref<32x1xf32, #tpu.memory_space<vmem>>, vector<32x1xf32>,
    %c1_i32 = arith.constant 1 : i32
    %21 = arith.cmpi eq, %arg0, %c1_i32 : i32
    %c0_i32_16 = arith.constant 0 : i32
    %22 = arith.cmpi eq, %arg1, %c0_i32_16 : i32
    %23 = arith.andi %21, %22 : i1
    %24 = arith.extui %23 : i1 to i32
    %c0_i32_17 = arith.constant 0 : i32
    %25 = arith.cmpi ne, %24, %c0_i32_17 : i32
    scf.if %25 {
      %c0_18 = arith.constant 0 : index
      %c0_19 = arith.constant 0 : index
      %26 = vector.load %arg6[%c0_18, %c0_19] : memref<32x1xf32, #tpu.memory_space<vmem>>, vector<32x1xf32>
      %c0_20 = arith.constant 0 : index
      %c0_21 = arith.constant 0 : index
      %27 = vector.load %arg7[%c0_20, %c0_21] : memref<32x1xf32, #tpu.memory_space<vmem>>, vector<32x1xf32>
      %cst_22 = arith.constant 1.024000e+03 : f32
      %28 = vector.broadcast %cst_22 : f32 to vector<32x1xf32>
      %29 = arith.divf %26, %28 : vector<32x1xf32>
      %cst_23 = arith.constant 1.024000e+03 : f32
      %30 = vector.broadcast %cst_23 : f32 to vector<32x1xf32>
      %31 = arith.divf %27, %30 : vector<32x1xf32>
      %32 = arith.mulf %29, %29 : vector<32x1xf32>
      %33 = arith.subf %31, %32 : vector<32x1xf32>
      %cst_24 = arith.constant 0.000000e+00 : f32
      %34 = vector.broadcast %cst_24 : f32 to vector<32x1xf32>
      %35 = arith.maximumf %33, %34 : vector<32x1xf32>
      %cst_25 = arith.constant 9.99999974E-6 : f32
      %36 = vector.broadcast %cst_25 : f32 to vector<32x1xf32>
      %37 = arith.addf %35, %36 : vector<32x1xf32>
      %38 = math.rsqrt %37 : vector<32x1xf32>
      %c0_26 = arith.constant 0 : index
      %c0_27 = arith.constant 0 : index
      %39 = vector.load %arg4[%c0_26, %c0_27] : memref<32x1xf32, #tpu.memory_space<vmem>>, vector<32x1xf32>
      %40 = arith.mulf %39, %38 : vector<32x1xf32>
      %c0_28 = arith.constant 0 : index
      %c0_29 = arith.constant 0 : index
      %41 = vector.load %arg5[%c0_28, %c0_29] : memref<32x1xf32, #tpu.memory_space<vmem>>, vector<32x1xf32>
      %42 = arith.mulf %29, %40 : vector<32x1xf32>
      %43 = arith.subf %41, %42 : vector<32x1xf32>
      %c0_30 = arith.constant 0 : index
      %c0_31 = arith.constant 0 : index
      %44 = vector.load %arg6[%c0_30, %c0_31] : memref<32x1xf32, #tpu.memory_space<vmem>>, vector<32x1xf32>
      tpu.vector_store %arg6[%c0_30, %c0_31], %40 {strides = array<i32>} : memref<32x1xf32, #tpu.memory_space<vmem>>, vector<32x1xf32>,
      %c0_32 = arith.constant 0 : index
      %c0_33 = arith.constant 0 : index
      %45 = vector.load %arg7[%c0_32, %c0_33] : memref<32x1xf32, #tpu.memory_space<vmem>>, vector<32x1xf32>
      tpu.vector_store %arg7[%c0_32, %c0_33], %43 {strides = array<i32>} : memref<32x1xf32, #tpu.memory_space<vmem>>, vector<32x1xf32>,
    } else {
    }
    return
  }
  func.func @transform_0(%arg0: i32, %arg1: i32) -> (i32, i32, i32) {
    %c0_i32 = arith.constant 0 : i32
    %c0_i32_0 = arith.constant 0 : i32
    return %arg0, %c0_i32, %arg1 : i32, i32, i32
  }
  func.func @transform_1(%arg0: i32, %arg1: i32) -> (i32, i32) {
    %c0_i32 = arith.constant 0 : i32
    %c0_i32_0 = arith.constant 0 : i32
    %c0_i32_1 = arith.constant 0 : i32
    return %c0_i32, %c0_i32_0 : i32, i32
  }
  func.func @transform_2(%arg0: i32, %arg1: i32) -> (i32, i32) {
    %c0_i32 = arith.constant 0 : i32
    %c0_i32_0 = arith.constant 0 : i32
    %c0_i32_1 = arith.constant 0 : i32
    return %c0_i32, %c0_i32_0 : i32, i32
  }
  func.func @transform_3(%arg0: i32, %arg1: i32) -> (i32, i32) {
    %c0_i32 = arith.constant 0 : i32
    %c0_i32_0 = arith.constant 0 : i32
    %c0_i32_1 = arith.constant 0 : i32
    return %c0_i32, %c0_i32_0 : i32, i32
  }
  func.func @transform_4(%arg0: i32, %arg1: i32) -> (i32, i32) {
    %c0_i32 = arith.constant 0 : i32
    %c0_i32_0 = arith.constant 0 : i32
    %c0_i32_1 = arith.constant 0 : i32
    return %c0_i32, %c0_i32_0 : i32, i32
  }
  func.func @transform_5(%arg0: i32, %arg1: i32) -> (i32, i32) {
    %c0_i32 = arith.constant 0 : i32
    %c0_i32_0 = arith.constant 0 : i32
    %c0_i32_1 = arith.constant 0 : i32
    return %c0_i32, %c0_i32_0 : i32, i32
  }
}

</mosaic_0001>

<llo_original>
// kernel: tpu_custom_call.1
$region0: #{tpu_custom_call.1}
  #allocation0 [shape = 'u32[]', space=smem, size = 0x4, offset = 0x4, fixed_abs, tag = 'smem constant byte address 0x4 - core index']
  #allocation1 [shape = 'u32[144,128]{1,0:T(1,128)}', space=vmem, size = 0x12000, scoped, tag = 'internal scratch']
  %s0 = inlined_call_operand.vmem [shape: f32[2,4,512], index: 0, kind: input, shape index: {}]
  %s1 = inlined_call_operand.vmem [shape: bf16[32,4], index: 1, kind: input, shape index: {}]
  %s2 = inlined_call_operand.vmem [shape: f32[32,1], index: 2, kind: input, shape index: {}]
  %s3 = inlined_call_operand.vmem [shape: f32[32,1], index: 3, kind: input, shape index: {}]
  %s4 = inlined_call_operand.vmem [shape: f32[32,1], index: 4, kind: output, shape index: {0}]
  %s5 = inlined_call_operand.vmem [shape: f32[32,1], index: 5, kind: output, shape index: {1}]
  %6 = xla_tuple %s4, %s5
  %s7 = sld [smem:[#allocation0]]
  $region65: #{tpu_custom_call.1} parent=0
    _
  %s9 = ssub.s32 1, %s7
  %s10 = scalar_select 0, %s9, %s7
  loop: start=0, step=1, limit=4
  $region2: #{tpu_custom_call.1} parent=0 // loop_pre_header
    _
  $region3: #{tpu_custom_call.1} parent=0 // loop_header
    %s12 = sphi 0, %s16
    %p13 = scmp.ge.s32.totalorder %s12, 4
    %s19 = sphi 0, %s31
    %s20 = sphi 0, %s27
    %s21 = sphi 0, %s19
    %s22 = sphi 0, %s20
    %s23 = sphi 0, %s21
    %s24 = sphi 0, %s22
    %s36 = sphi 0, %s38
    %s39 = sphi 0, %s36
    %s40 = sphi 0, %s39
    %s56 = sphi 0, %s40
    %s60 = sphi 0, %s60
    %s62 = sphi 0, %s60
    %s63 = sphi 0, %s62
    %s77 = sphi 0, %s63
    %s81 = sphi 0, %s81
    %s83 = sphi 0, %s81
    %s84 = sphi 0, %s83
    %s98 = sphi 0, %s84
    %s102 = sphi 0, %s102
    %s104 = sphi 0, %s102
    %s105 = sphi 0, %s104
    %s119 = sphi 0, %s105
    %s123 = sphi 0, %s123
    %s125 = sphi 0, %s123
    %s126 = sphi 0, %s125
    %s140 = sphi 0, %s126
    %s144 = sphi 0, %s144
    %s146 = sphi 0, %s144
    %s147 = sphi 0, %s146
    %s161 = sphi 0, %s147
  $region4: #{tpu_custom_call.1} parent=0 // loop_header_branch
    %15 = sbr.rel (%p13) target = $region8
  $region5: #{tpu_custom_call.1} parent=0 // loop_body
    %s17 = ssub.s32 %s12, 1
    %s18 = ssub.s32 %s12, 2
    %s25 = sadd.s32 1, %s20
    %p26 = scmp.ge.s32.totalorder %s25, 1
    %s27 = scalar_select %p26, 0, %s25
    %s28 = sadd.s32 1, %s19
    %s29 = scalar_select %p26, %s28, %s19
    %p30 = scmp.ge.s32.totalorder %s29, 2
    %s31 = scalar_select %p30, 0, %s29
    %s32 = ssub.s32 %s19, %s31
    %s33 = ssub.s32 %s20, %s27
    %s34 = sor.u32 %s32, %s33
    %p35 = scmp.eq.s32.totalorder %s34, 0
    %s37 = sadd.s32 %s36, 1
    %s38 = scalar_select %p35, %s36, %s37
    %p41 = pneg %p35
    %p42 = scmp.eq.s32.totalorder %s12, 1
    %p43 = por %p41, %p42
    %p44 = scmp.ne.s32.totalorder %s36, %s39
    %p45 = scmp.eq.s32.totalorder %s12, 0
    %p46 = por %p44, %p45
    %p47 = scmp.ne.s32.totalorder %s36, %s39
    %p48 = scmp.eq.s32.totalorder %s17, 1
    %p49 = por %p47, %p48
    %p50 = scmp.ne.s32.totalorder %s39, %s40
    %p51 = scmp.eq.s32.totalorder %s17, 0
    %p52 = por %p50, %p51
    %p53 = scmp.ne.s32.totalorder %s39, %s40
    %p54 = scmp.eq.s32.totalorder %s18, 1
    %p55 = por %p53, %p54
    %p57 = scmp.ne.s32.totalorder %s40, %s56
    %p58 = scmp.eq.s32.totalorder %s18, 0
    %p59 = por %p57, %p58
    %s61 = sadd.s32 %s60, 1
    %p64 = scmp.eq.s32.totalorder %s12, 1
    %p65 = scmp.ne.s32.totalorder %s60, %s62
    %p66 = scmp.eq.s32.totalorder %s12, 0
    %p67 = por %p65, %p66
    %p68 = scmp.ne.s32.totalorder %s60, %s62
    %p69 = scmp.eq.s32.totalorder %s17, 1
    %p70 = por %p68, %p69
    %p71 = scmp.ne.s32.totalorder %s62, %s63
    %p72 = scmp.eq.s32.totalorder %s17, 0
    %p73 = por %p71, %p72
    %p74 = scmp.ne.s32.totalorder %s62, %s63
    %p75 = scmp.eq.s32.totalorder %s18, 1
    %p76 = por %p74, %p75
    %p78 = scmp.ne.s32.totalorder %s63, %s77
    %p79 = scmp.eq.s32.totalorder %s18, 0
    %p80 = por %p78, %p79
    %s82 = sadd.s32 %s81, 1
    %p85 = scmp.eq.s32.totalorder %s12, 1
    %p86 = scmp.ne.s32.totalorder %s81, %s83
    %p87 = scmp.eq.s32.totalorder %s12, 0
    %p88 = por %p86, %p87
    %p89 = scmp.ne.s32.totalorder %s81, %s83
    %p90 = scmp.eq.s32.totalorder %s17, 1
    %p91 = por %p89, %p90
    %p92 = scmp.ne.s32.totalorder %s83, %s84
    %p93 = scmp.eq.s32.totalorder %s17, 0
    %p94 = por %p92, %p93
    %p95 = scmp.ne.s32.totalorder %s83, %s84
    %p96 = scmp.eq.s32.totalorder %s18, 1
    %p97 = por %p95, %p96
    %p99 = scmp.ne.s32.totalorder %s84, %s98
    %p100 = scmp.eq.s32.totalorder %s18, 0
    %p101 = por %p99, %p100
    %s103 = sadd.s32 %s102, 1
    %p106 = scmp.eq.s32.totalorder %s12, 1
    %p107 = scmp.ne.s32.totalorder %s102, %s104
    %p108 = scmp.eq.s32.totalorder %s12, 0
    %p109 = por %p107, %p108
    %p110 = scmp.ne.s32.totalorder %s102, %s104
    %p111 = scmp.eq.s32.totalorder %s17, 1
    %p112 = por %p110, %p111
    %p113 = scmp.ne.s32.totalorder %s104, %s105
    %p114 = scmp.eq.s32.totalorder %s17, 0
    %p115 = por %p113, %p114
    %p116 = scmp.ne.s32.totalorder %s104, %s105
    %p117 = scmp.eq.s32.totalorder %s18, 1
    %p118 = por %p116, %p117
    %p120 = scmp.ne.s32.totalorder %s105, %s119
    %p121 = scmp.eq.s32.totalorder %s18, 0
    %p122 = por %p120, %p121
    %s124 = sadd.s32 %s123, 1
    %p127 = scmp.eq.s32.totalorder %s12, 1
    %p128 = scmp.ne.s32.totalorder %s123, %s125
    %p129 = scmp.eq.s32.totalorder %s12, 0
    %p130 = por %p128, %p129
    %p131 = scmp.ne.s32.totalorder %s123, %s125
    %p132 = scmp.eq.s32.totalorder %s17, 1
    %p133 = por %p131, %p132
    %p134 = scmp.ne.s32.totalorder %s125, %s126
    %p135 = scmp.eq.s32.totalorder %s17, 0
    %p136 = por %p134, %p135
    %p137 = scmp.ne.s32.totalorder %s125, %s126
    %p138 = scmp.eq.s32.totalorder %s18, 1
    %p139 = por %p137, %p138
    %p141 = scmp.ne.s32.totalorder %s126, %s140
    %p142 = scmp.eq.s32.totalorder %s18, 0
    %p143 = por %p141, %p142
    %s145 = sadd.s32 %s144, 1
    %p148 = scmp.eq.s32.totalorder %s12, 1
    %p149 = scmp.ne.s32.totalorder %s144, %s146
    %p150 = scmp.eq.s32.totalorder %s12, 0
    %p151 = por %p149, %p150
    %p152 = scmp.ne.s32.totalorder %s144, %s146
    %p153 = scmp.eq.s32.totalorder %s17, 1
    %p154 = por %p152, %p153
    %p155 = scmp.ne.s32.totalorder %s146, %s147
    %p156 = scmp.eq.s32.totalorder %s17, 0
    %p157 = por %p155, %p156
    %p158 = scmp.ne.s32.totalorder %s146, %s147
    %p159 = scmp.eq.s32.totalorder %s18, 1
    %p160 = por %p158, %p159
    %p162 = scmp.ne.s32.totalorder %s147, %s161
    %p163 = scmp.eq.s32.totalorder %s18, 0
    %p164 = por %p162, %p163
    %p165 = scmp.le.s32.totalorder 1, %s12
    %p166 = scmp.lt.s32.totalorder %s12, 3
    %p167 = pnand %p165, %p166
    %p168 = pneg %p167
    // Predicated region
    $region9: #{tpu_custom_call.1} parent=5 // pred_check
      _
    $region10: #{tpu_custom_call.1} parent=5 // pred_check_branch
      %170 = sbr.rel (%p167) target = $region12
    $region11: #{tpu_custom_call.1} parent=5 // pred_region
      %s171 = ssub.s32 %s12, 1
      // Predicated region
      $region13: #{tpu_custom_call.1} parent=11 // pred_check
        %p172 = pneg %p73
      $region14: #{tpu_custom_call.1} parent=11 // pred_check_branch
        %174 = sbr.rel (%p172) target = $region16
      $region15: #{tpu_custom_call.1} parent=11 // pred_region
        _
      $region16: #{tpu_custom_call.1} parent=11 // pred_fallthru
        _
      // Predicated region
      $region17: #{tpu_custom_call.1} parent=11 // pred_check
        %p175 = pneg %p94
      $region18: #{tpu_custom_call.1} parent=11 // pred_check_branch
        %177 = sbr.rel (%p175) target = $region20
      $region19: #{tpu_custom_call.1} parent=11 // pred_region
        _
      $region20: #{tpu_custom_call.1} parent=11 // pred_fallthru
        _
      // Predicated region
      $region21: #{tpu_custom_call.1} parent=11 // pred_check
        %p178 = pneg %p115
      $region22: #{tpu_custom_call.1} parent=11 // pred_check_branch
        %180 = sbr.rel (%p178) target = $region24
      $region23: #{tpu_custom_call.1} parent=11 // pred_region
        _
      $region24: #{tpu_custom_call.1} parent=11 // pred_fallthru
        _
    $region12: #{tpu_custom_call.1} parent=5 // pred_fallthru
      _
    %p181 = scmp.lt.s32.totalorder %s12, 2
    // Predicated region
    $region25: #{tpu_custom_call.1} parent=5 // pred_check
      %p182 = pneg %p181
    $region26: #{tpu_custom_call.1} parent=5 // pred_check_branch
      %184 = sbr.rel (%p182) target = $region28
    $region27: #{tpu_custom_call.1} parent=5 // pred_region
      // Predicated region
      $region29: #{tpu_custom_call.1} parent=27 // pred_check
        %p185 = pneg %p46
      $region30: #{tpu_custom_call.1} parent=27 // pred_check_branch
        %187 = sbr.rel (%p185) target = $region32
      $region31: #{tpu_custom_call.1} parent=27 // pred_region
        %s188 = smul.u32 4, %s20
        %p189 = scmp.lt.s32.totalorder %s19, 1
        %s190 = scalar_select %p189, %s19, 1
        %p191 = scmp.lt.s32.totalorder %s188, 3
        %s192 = scalar_select %p191, %s188, 3
        %s193 = smul.addr %s190, 4
        %s194 = sadd.s32 %s192, %s193
        %s195 = smul.addr %s194, 4
        %s196 = scalar_lea.vmem %s0, %s195
        %s197 = smul.u32 4, %s20
      $region32: #{tpu_custom_call.1} parent=27 // pred_fallthru
        _
    $region28: #{tpu_custom_call.1} parent=5 // pred_fallthru
      _
    %p198 = scmp.le.s32.totalorder 1, %s12
    %p199 = scmp.lt.s32.totalorder %s12, 3
    %p200 = pnand %p198, %p199
    %p201 = pneg %p200
    // Predicated region
    $region33: #{tpu_custom_call.1} parent=5 // pred_check
      _
    $region34: #{tpu_custom_call.1} parent=5 // pred_check_branch
      %203 = sbr.rel (%p200) target = $region36
    $region35: #{tpu_custom_call.1} parent=5 // pred_region
      %s204 = ssub.s32 %s12, 1
      %s205 = smul.u32 4, %s22
      %p206 = scmp.lt.s32.totalorder %s21, 1
      %s207 = scalar_select %p206, %s21, 1
      %p208 = scmp.lt.s32.totalorder %s205, 3
      %s209 = scalar_select %p208, %s205, 3
      %s210 = smul.addr %s207, 4
      %s211 = sadd.s32 %s209, %s210
      %s212 = smul.addr %s211, 4
      %s213 = scalar_lea.vmem %s0, %s212
      %p214 = pneg %p52
      %p215 = pneg %p49
      %p216 = pneg %p73
      %p217 = pneg %p70
      %p218 = pneg %p94
      %p219 = pneg %p91
      %p220 = pneg %p115
      %p221 = pneg %p112
      %p222 = pneg %p136
      %p223 = pneg %p133
      %p224 = pneg %p157
      %p225 = pneg %p154
      %s226 = smul.u32 4, %s22
      %p227 = scmp.lt.s32.totalorder %s21, 1
      %s228 = scalar_select %p227, %s21, 1
      %p229 = scmp.lt.s32.totalorder %s226, 3
      %s230 = scalar_select %p229, %s226, 3
      %s231 = smul.addr %s228, 4
      %s232 = sadd.s32 %s230, %s231
      %s233 = smul.addr %s232, 4
      %s234 = scalar_lea.vmem %s0, %s233
      %s235 = smul.u32 4, %s22
      %p237 = scmp.eq.s32.totalorder %s21, 0
      %p238 = scmp.eq.s32.totalorder %s22, 0
      %p239 = pnand %p237, %p238
      %p240 = pneg %p239
      // Predicated region
      $region37: #{tpu_custom_call.1} parent=35 // pred_check
        _
      $region38: #{tpu_custom_call.1} parent=35 // pred_check_branch
        %242 = sbr.rel (%p239) target = $region40
      $region39: #{tpu_custom_call.1} parent=35 // pred_region
        %vm243 = vcmask 7168
        %244 = vst.msk [vmem:[%s4] sm:$0xff] %vm243, 0.0
        %245 = vst.msk [vmem:[%s4 + $0x8] sm:$0xff] %vm243, 0.0
        %246 = vst.msk [vmem:[%s4 + $0x10] sm:$0xff] %vm243, 0.0
        %247 = vst.msk [vmem:[%s4 + $0x18] sm:$0xff] %vm243, 0.0
        %248 = vst.msk [vmem:[%s5] sm:$0xff] %vm243, 0.0
        %249 = vst.msk [vmem:[%s5 + $0x8] sm:$0xff] %vm243, 0.0
        %250 = vst.msk [vmem:[%s5 + $0x10] sm:$0xff] %vm243, 0.0
        %251 = vst.msk [vmem:[%s5 + $0x18] sm:$0xff] %vm243, 0.0
      $region40: #{tpu_custom_call.1} parent=35 // pred_fallthru
        _
      %v252 = vld [vmem:[%s234] sm:$0xff]
      %v253 = vld [vmem:[%s234 + $0x8] sm:$0xff]
      %v256 = vcombine.high %v252, %v252
      %v257 = vcombine.high %v253, %v253
      %v260 = vpack.c.bf16 %v252, %v252
      %v261 = vpack.c.bf16 %v256, %v256
      %v262 = vpack.c.bf16 %v253, %v253
      %v263 = vpack.c.bf16 %v257, %v257
      %v264 = vld [vmem:[%s1] sm:$0xf]
      %v265 = vld [vmem:[%s1 + $0x4] sm:$0xf]
      %v266 = vld [vmem:[%s1 + $0x8] sm:$0xf]
      %v267 = vld [vmem:[%s1 + $0xc] sm:$0xf]
      %v272 = vunpack.c.l.b16 %v264
      %v273 = vunpack.c.l.b16 %v265
      %v274 = vunpack.c.l.b16 %v266
      %v275 = vunpack.c.l.b16 %v267
      %v276 = vpack.c.b16 %v273, %v272
      %v277 = vpack.c.b16 %v275, %v274
      %vm278 = vcmask 31744
      %v280 = vsel %vm278, %v276, 0
      %v283 = vsel %vm278, %v277, 0
      %vm285 = vcmask 1041408
      %v287 = vsel %vm285, %v260, 0
      %v290 = vsel %vm285, %v261, 0
      %v293 = vsel %vm285, %v262, 0
      %v296 = vsel %vm285, %v263, 0
      %298 = vmatprep.subr.bf16.mxu0 %v290
      %299 = vmatpush1.bf16.msra.mxu0 %v287
      %300 = vmatprep.subr.bf16.mxu0 0
      %301 = vmatpush1.bf16.msra.mxu0 0
      %302 = vmatprep.subr.bf16.mxu0 0
      %303 = vmatpush1.bf16.msra.mxu0 0
      %304 = vmatprep.subr.bf16.mxu0 0
      %305 = vmatpush1.bf16.msra.mxu0 0
      %306 = vmatprep.subr.bf16.mxu0 0
      %307 = vmatpush1.bf16.msra.mxu0 0
      %308 = vmatprep.subr.bf16.mxu0 0
      %309 = vmatpush1.bf16.msra.mxu0 0
      %310 = vmatprep.subr.bf16.mxu0 0
      %311 = vmatpush1.bf16.msra.mxu0 0
      %312 = vmatprep.subr.bf16.mxu0 0
      %313 = vmatpush1.bf16.msra.mxu0 0
      %314 = vmatprep.subr.bf16.mxu0 0
      %315 = vmatpush1.bf16.msra.mxu0 0
      %316 = vmatprep.subr.bf16.mxu0 0
      %317 = vmatpush1.bf16.msra.mxu0 0
      %318 = vmatprep.subr.bf16.mxu0 0
      %319 = vmatpush1.bf16.msra.mxu0 0
      %320 = vmatprep.subr.bf16.mxu0 0
      %321 = vmatpush1.bf16.msra.mxu0 0
      %322 = vmatprep.subr.bf16.mxu0 0
      %323 = vmatpush1.bf16.msra.mxu0 0
      %324 = vmatprep.subr.bf16.mxu0 0
      %325 = vmatpush1.bf16.msra.mxu0 0
      %326 = vmatprep.subr.bf16.mxu0 0
      %327 = vmatpush1.bf16.msra.mxu0 0
      %328 = vmatprep.subr.bf16.mxu0 0
      %329 = vmatpush1.bf16.msra.mxu0 0
      %330 = vmatprep.mubr.bf16.mxu0 0
      %331 = vmatmul.mubr.bf16.gmra.mrb[0].mxu0 %v280
      %v332 = vpop.f32.mrb[0].mxu0
      %v333 = vadd.f32 0.0, %v332
      %v334 = vpop.f32.mrb[0].mxu0
      %v335 = vadd.f32 0.0, %v334
      %v336 = vpop.f32.mrb[0].mxu0
      %v337 = vadd.f32 0.0, %v336
      %v338 = vpop.f32.mrb[0].mxu0
      %v339 = vadd.f32 0.0, %v338
      %340 = vmatprep.mubr.bf16.mxu0 0
      %341 = vmatmul.mubr.bf16.gmra.mrb[0].mxu0 %v283
      %v342 = vpop.f32.mrb[0].mxu0
      %v343 = vadd.f32 0.0, %v342
      %v344 = vpop.f32.mrb[0].mxu0
      %v345 = vadd.f32 0.0, %v344
      %v346 = vpop.f32.mrb[0].mxu0
      %v347 = vadd.f32 0.0, %v346
      %v348 = vpop.f32.mrb[0].mxu0
      %v349 = vadd.f32 0.0, %v348
      %350 = vdwg.mxu0
      %351 = vmatprep.subr.bf16.mxu0 %v296
      %352 = vmatpush1.bf16.msra.mxu0 %v293
      %353 = vmatprep.subr.bf16.mxu0 0
      %354 = vmatpush1.bf16.msra.mxu0 0
      %355 = vmatprep.subr.bf16.mxu0 0
      %356 = vmatpush1.bf16.msra.mxu0 0
      %357 = vmatprep.subr.bf16.mxu0 0
      %358 = vmatpush1.bf16.msra.mxu0 0
      %359 = vmatprep.subr.bf16.mxu0 0
      %360 = vmatpush1.bf16.msra.mxu0 0
      %361 = vmatprep.subr.bf16.mxu0 0
      %362 = vmatpush1.bf16.msra.mxu0 0
      %363 = vmatprep.subr.bf16.mxu0 0
      %364 = vmatpush1.bf16.msra.mxu0 0
      %365 = vmatprep.subr.bf16.mxu0 0
      %366 = vmatpush1.bf16.msra.mxu0 0
      %367 = vmatprep.subr.bf16.mxu0 0
      %368 = vmatpush1.bf16.msra.mxu0 0
      %369 = vmatprep.subr.bf16.mxu0 0
      %370 = vmatpush1.bf16.msra.mxu0 0
      %371 = vmatprep.subr.bf16.mxu0 0
      %372 = vmatpush1.bf16.msra.mxu0 0
      %373 = vmatprep.subr.bf16.mxu0 0
      %374 = vmatpush1.bf16.msra.mxu0 0
      %375 = vmatprep.subr.bf16.mxu0 0
      %376 = vmatpush1.bf16.msra.mxu0 0
      %377 = vmatprep.subr.bf16.mxu0 0
      %378 = vmatpush1.bf16.msra.mxu0 0
      %379 = vmatprep.subr.bf16.mxu0 0
      %380 = vmatpush1.bf16.msra.mxu0 0
      %381 = vmatprep.subr.bf16.mxu0 0
      %382 = vmatpush1.bf16.msra.mxu0 0
      %383 = vmatprep.mubr.bf16.mxu0 0
      %384 = vmatmul.mubr.bf16.gmra.mrb[0].mxu0 %v280
      %v385 = vpop.f32.mrb[0].mxu0
      %v386 = vadd.f32 0.0, %v385
      %v387 = vpop.f32.mrb[0].mxu0
      %v388 = vadd.f32 0.0, %v387
      %v389 = vpop.f32.mrb[0].mxu0
      %v390 = vadd.f32 0.0, %v389
      %v391 = vpop.f32.mrb[0].mxu0
      %v392 = vadd.f32 0.0, %v391
      %393 = vmatprep.mubr.bf16.mxu0 0
      %394 = vmatmul.mubr.bf16.gmra.mrb[0].mxu0 %v283
      %v395 = vpop.f32.mrb[0].mxu0
      %v396 = vadd.f32 0.0, %v395
      %v397 = vpop.f32.mrb[0].mxu0
      %v398 = vadd.f32 0.0, %v397
      %v399 = vpop.f32.mrb[0].mxu0
      %v400 = vadd.f32 0.0, %v399
      %v401 = vpop.f32.mrb[0].mxu0
      %v402 = vadd.f32 0.0, %v401
      %403 = vdwg.mxu0
      %v404 = vld [vmem:[%s4] sm:$0xff]
      %v405 = vld [vmem:[%s4 + $0x8] sm:$0xff]
      %v406 = vld [vmem:[%s4 + $0x10] sm:$0xff]
      %v407 = vld [vmem:[%s4 + $0x18] sm:$0xff]
      %v408 = vadd.f32 %v333, %v335
      %v409 = vadd.f32 %v408, %v386
      %v410 = vadd.f32 %v409, %v388
      %411 = vadd.xlane.f32.xlu0 %v410
      %v412 = vpop.xlane.xlu0 %411
      %v413 = vadd.f32 %v337, %v339
      %v414 = vadd.f32 %v413, %v390
      %v415 = vadd.f32 %v414, %v392
      %416 = vadd.xlane.f32.xlu0 %v415
      %v417 = vpop.xlane.xlu0 %416
      %v418 = vadd.f32 %v343, %v345
      %v419 = vadd.f32 %v418, %v396
      %v420 = vadd.f32 %v419, %v398
      %421 = vadd.xlane.f32.xlu0 %v420
      %v422 = vpop.xlane.xlu0 %421
      %v423 = vadd.f32 %v347, %v349
      %v424 = vadd.f32 %v423, %v400
      %v425 = vadd.f32 %v424, %v402
      %426 = vadd.xlane.f32.xlu0 %v425
      %v427 = vpop.xlane.xlu0 %426
      %v428 = vadd.f32 %v404, %v412
      %v429 = vadd.f32 %v405, %v417
      %v430 = vadd.f32 %v406, %v422
      %v431 = vadd.f32 %v407, %v427
      %vm432 = vcmask 7168
      %433 = vst.msk [vmem:[%s4] sm:$0xff] %vm432, %v428
      %434 = vst.msk [vmem:[%s4 + $0x8] sm:$0xff] %vm432, %v429
      %435 = vst.msk [vmem:[%s4 + $0x10] sm:$0xff] %vm432, %v430
      %436 = vst.msk [vmem:[%s4 + $0x18] sm:$0xff] %vm432, %v431
      %v437 = vld [vmem:[%s5] sm:$0xff]
      %v438 = vld [vmem:[%s5 + $0x8] sm:$0xff]
      %v439 = vld [vmem:[%s5 + $0x10] sm:$0xff]
      %v440 = vld [vmem:[%s5 + $0x18] sm:$0xff]
      %v441 = vmul.f32 %v333, %v333
      %v442 = vmul.f32 %v335, %v335
      %v443 = vmul.f32 %v386, %v386
      %v444 = vmul.f32 %v388, %v388
      %v445 = vmul.f32 %v337, %v337
      %v446 = vmul.f32 %v339, %v339
      %v447 = vmul.f32 %v390, %v390
      %v448 = vmul.f32 %v392, %v392
      %v449 = vmul.f32 %v343, %v343
      %v450 = vmul.f32 %v345, %v345
      %v451 = vmul.f32 %v396, %v396
      %v452 = vmul.f32 %v398, %v398
      %v453 = vmul.f32 %v347, %v347
      %v454 = vmul.f32 %v349, %v349
      %v455 = vmul.f32 %v400, %v400
      %v456 = vmul.f32 %v402, %v402
      %v457 = vadd.f32 %v441, %v442
      %v458 = vadd.f32 %v457, %v443
      %v459 = vadd.f32 %v458, %v444
      %460 = vadd.xlane.f32.xlu0 %v459
      %v461 = vpop.xlane.xlu0 %460
      %v462 = vadd.f32 %v445, %v446
      %v463 = vadd.f32 %v462, %v447
      %v464 = vadd.f32 %v463, %v448
      %465 = vadd.xlane.f32.xlu0 %v464
      %v466 = vpop.xlane.xlu0 %465
      %v467 = vadd.f32 %v449, %v450
      %v468 = vadd.f32 %v467, %v451
      %v469 = vadd.f32 %v468, %v452
      %470 = vadd.xlane.f32.xlu0 %v469
      %v471 = vpop.xlane.xlu0 %470
      %v472 = vadd.f32 %v453, %v454
      %v473 = vadd.f32 %v472, %v455
      %v474 = vadd.f32 %v473, %v456
      %475 = vadd.xlane.f32.xlu0 %v474
      %v476 = vpop.xlane.xlu0 %475
      %v477 = vadd.f32 %v437, %v461
      %v478 = vadd.f32 %v438, %v466
      %v479 = vadd.f32 %v439, %v471
      %v480 = vadd.f32 %v440, %v476
      %481 = vst.msk [vmem:[%s5] sm:$0xff] %vm432, %v477
      %482 = vst.msk [vmem:[%s5 + $0x8] sm:$0xff] %vm432, %v478
      %483 = vst.msk [vmem:[%s5 + $0x10] sm:$0xff] %vm432, %v479
      %484 = vst.msk [vmem:[%s5 + $0x18] sm:$0xff] %vm432, %v480
      %p485 = scmp.eq.s32.totalorder %s21, 1
      %p486 = pnand %p485, %p238
      %p487 = pneg %p486
      // Predicated region
      $region41: #{tpu_custom_call.1} parent=35 // pred_check
        _
      $region42: #{tpu_custom_call.1} parent=35 // pred_check_branch
        %489 = sbr.rel (%p486) target = $region44
      $region43: #{tpu_custom_call.1} parent=35 // pred_region
        %v490 = vld [vmem:[%s4] sm:$0xff]
        %v491 = vld [vmem:[%s4 + $0x8] sm:$0xff]
        %v492 = vld [vmem:[%s4 + $0x10] sm:$0xff]
        %v493 = vld [vmem:[%s4 + $0x18] sm:$0xff]
        %v494 = vld [vmem:[%s5] sm:$0xff]
        %v495 = vld [vmem:[%s5 + $0x8] sm:$0xff]
        %v496 = vld [vmem:[%s5 + $0x10] sm:$0xff]
        %v497 = vld [vmem:[%s5 + $0x18] sm:$0xff]
        %v498 = vrcp.pop 1024.0
        %v499 = vmul.f32 %v490, %v498
        %v500 = vmul.f32 %v491, %v498
        %v501 = vmul.f32 %v492, %v498
        %v502 = vmul.f32 %v493, %v498
        %v503 = vmul.f32 %v494, %v498
        %v504 = vmul.f32 %v495, %v498
        %v505 = vmul.f32 %v496, %v498
        %v506 = vmul.f32 %v497, %v498
        %v507 = vmul.f32 %v499, %v499
        %v508 = vmul.f32 %v500, %v500
        %v509 = vmul.f32 %v501, %v501
        %v510 = vmul.f32 %v502, %v502
        %v511 = vsub.f32 %v503, %v507
        %v512 = vsub.f32 %v504, %v508
        %v513 = vsub.f32 %v505, %v509
        %v514 = vsub.f32 %v506, %v510
        %v515 = vmax.f32 %v511, 0.0
        %v516 = vmax.f32 %v512, 0.0
        %v517 = vmax.f32 %v513, 0.0
        %v518 = vmax.f32 %v514, 0.0
        %v519 = vadd.f32 %v515, 1e-05
        %v520 = vadd.f32 %v516, 1e-05
        %v521 = vadd.f32 %v517, 1e-05
        %v522 = vadd.f32 %v518, 1e-05
        %v523 = vrsqrt.pop %v519
        %v524 = vrsqrt.pop %v520
        %v525 = vrsqrt.pop %v521
        %v526 = vrsqrt.pop %v522
        %v527 = vld [vmem:[%s2] sm:$0xff]
        %v528 = vld [vmem:[%s2 + $0x8] sm:$0xff]
        %v529 = vld [vmem:[%s2 + $0x10] sm:$0xff]
        %v530 = vld [vmem:[%s2 + $0x18] sm:$0xff]
        %v531 = vmul.f32 %v527, %v523
        %v532 = vmul.f32 %v528, %v524
        %v533 = vmul.f32 %v529, %v525
        %v534 = vmul.f32 %v530, %v526
        %v535 = vld [vmem:[%s3] sm:$0xff]
        %v536 = vld [vmem:[%s3 + $0x8] sm:$0xff]
        %v537 = vld [vmem:[%s3 + $0x10] sm:$0xff]
        %v538 = vld [vmem:[%s3 + $0x18] sm:$0xff]
        %v539 = vmul.f32 %v499, %v531
        %v540 = vmul.f32 %v500, %v532
        %v541 = vmul.f32 %v501, %v533
        %v542 = vmul.f32 %v502, %v534
        %v543 = vsub.f32 %v535, %v539
        %v544 = vsub.f32 %v536, %v540
        %v545 = vsub.f32 %v537, %v541
        %v546 = vsub.f32 %v538, %v542
        %547 = vst.msk [vmem:[%s4] sm:$0xff] %vm432, %v531
        %548 = vst.msk [vmem:[%s4 + $0x8] sm:$0xff] %vm432, %v532
        %549 = vst.msk [vmem:[%s4 + $0x10] sm:$0xff] %vm432, %v533
        %550 = vst.msk [vmem:[%s4 + $0x18] sm:$0xff] %vm432, %v534
        %551 = vst.msk [vmem:[%s5] sm:$0xff] %vm432, %v543
        %552 = vst.msk [vmem:[%s5 + $0x8] sm:$0xff] %vm432, %v544
        %553 = vst.msk [vmem:[%s5 + $0x10] sm:$0xff] %vm432, %v545
        %554 = vst.msk [vmem:[%s5 + $0x18] sm:$0xff] %vm432, %v546
      $region44: #{tpu_custom_call.1} parent=35 // pred_fallthru
        _
      // Predicated region
      $region45: #{tpu_custom_call.1} parent=35 // pred_check
        %p555 = pneg %p133
      $region46: #{tpu_custom_call.1} parent=35 // pred_check_branch
        %557 = sbr.rel (%p555) target = $region48
      $region47: #{tpu_custom_call.1} parent=35 // pred_region
        _
      $region48: #{tpu_custom_call.1} parent=35 // pred_fallthru
        _
      // Predicated region
      $region49: #{tpu_custom_call.1} parent=35 // pred_check
        %p558 = pneg %p154
      $region50: #{tpu_custom_call.1} parent=35 // pred_check_branch
        %560 = sbr.rel (%p558) target = $region52
      $region51: #{tpu_custom_call.1} parent=35 // pred_region
        _
      $region52: #{tpu_custom_call.1} parent=35 // pred_fallthru
        _
      // Predicated region
      $region53: #{tpu_custom_call.1} parent=35 // pred_check
        %p561 = pneg %p133
      $region54: #{tpu_custom_call.1} parent=35 // pred_check_branch
        %563 = sbr.rel (%p561) target = $region56
      $region55: #{tpu_custom_call.1} parent=35 // pred_region
        _
      $region56: #{tpu_custom_call.1} parent=35 // pred_fallthru
        _
      // Predicated region
      $region57: #{tpu_custom_call.1} parent=35 // pred_check
        %p564 = pneg %p154
      $region58: #{tpu_custom_call.1} parent=35 // pred_check_branch
        %566 = sbr.rel (%p564) target = $region60
      $region59: #{tpu_custom_call.1} parent=35 // pred_region
        _
      $region60: #{tpu_custom_call.1} parent=35 // pred_fallthru
        _
    $region36: #{tpu_custom_call.1} parent=5 // pred_fallthru
      _
    %p567 = scmp.le.s32.totalorder 2, %s12
    // Predicated region
    $region61: #{tpu_custom_call.1} parent=5 // pred_check
      %p568 = pneg %p567
    $region62: #{tpu_custom_call.1} parent=5 // pred_check_branch
      %570 = sbr.rel (%p568) target = $region64
    $region63: #{tpu_custom_call.1} parent=5 // pred_region
      %s571 = ssub.s32 %s12, 2
    $region64: #{tpu_custom_call.1} parent=5 // pred_fallthru
      _
  $region6: #{tpu_custom_call.1} parent=0 // loop_footer
    %s16 = sadd.s32 1, %s12
  $region7: #{tpu_custom_call.1} parent=0 // loop_footer_branch
    %11 = sbr.rel target = $region3
  $region8: #{tpu_custom_call.1} parent=0 // loop_exit
    _

</llo_original>
